<compile_context>
chip_gen: v7x
topology: tpu7x:2x2x1
jax: 0.10.0
libtpu: 0.0.40
codegen_flags: <defaults>
</compile_context>

<pallas_src>
import functools

import jax
import jax.numpy as jnp
from jax.experimental import pallas as pl
from jax.experimental.pallas import tpu as pltpu

HIDDEN = 256
_LANE = 128


def _round_up(x, m):
    return ((x + m - 1) // m) * m


def _mlp_kernel(x_ref, w1_ref, b1_ref, w2_ref, b2_ref, w3_ref, b3_ref, o_ref):
    # Layer 1: relu(x_pad @ W1_pad + b1)   (bf16 MXU inputs, f32 accumulate)
    h1 = jnp.dot(x_ref[...], w1_ref[...], preferred_element_type=jnp.float32)
    h1 = jnp.maximum(h1 + b1_ref[...], 0.0)

    # Layer 2: relu(h1 @ W2 + b2)          (cast activations to bf16 for MXU only)
    # Note: if a bundle dump shows the vld/vst slot saturating before the MXU at
    # large tb, split this dot over 128-column N-slices of W2 (lax.fori_loop).
    h2 = jnp.dot(h1.astype(w2_ref.dtype), w2_ref[...],
                 preferred_element_type=jnp.float32)
    h2 = jnp.maximum(h2 + b2_ref[...], 0.0)

    # Layer 3 (lane-dense): VPU multiply by the w3 row + XLU lane-reduce,
    # scalar bias from SMEM; write a (1, tb) row -> unmasked lane-dense stores.
    r = jnp.sum(h2 * w3_ref[...], axis=-1) + b3_ref[0, 0]
    o_ref[...] = r[None, :].astype(o_ref.dtype)


@functools.partial(jax.jit, static_argnames=("tb", "weight_dtype"))
def lip_random_reward(state, action, params, tb=256, weight_dtype=jnp.bfloat16):
    """Fused 3-layer MLP reward head. state:[B,S], action:[B,A] -> [B,1]."""
    assert tb % _LANE == 0, "batch tile must be a multiple of 128"
    w1, b1, w2, b2, w3, b3 = params
    B, S = state.shape
    _, A = action.shape
    K = S + A

    # ---- choose the effective batch tile (static under jit) -----------------
    b_min = _round_up(B, _LANE)
    tb_eff = min(tb, b_min)
    # Keep >= 2 grid steps when the batch allows it (v7x has 2 TensorCores).
    if b_min >= 2 * _LANE and pl.cdiv(b_min, tb_eff) < 2:
        tb_eff = max(_LANE, _round_up(b_min // 2, _LANE))
    B_pad = _round_up(B, tb_eff)
    num_tiles = B_pad // tb_eff

    # ---- pack inputs/weights (pads & casts done once, outside the kernel) ---
    K_pad = _round_up(K, _LANE)
    x = jnp.concatenate([state, action], axis=1)                        # [B, K]
    x = jnp.pad(x, ((0, B_pad - B), (0, K_pad - K))).astype(weight_dtype)
    w1p = jnp.pad(w1, ((0, K_pad - K), (0, 0))).astype(weight_dtype)    # [K_pad, 256]
    w2c = w2.astype(weight_dtype)                                       # [256, 256]
    b1f = b1.reshape(1, HIDDEN).astype(jnp.float32)
    b2f = b2.reshape(1, HIDDEN).astype(jnp.float32)
    w3r = w3.reshape(1, HIDDEN).astype(jnp.float32)                     # lane-dense row
    b3s = b3.reshape(1, 1).astype(jnp.float32)                          # SMEM scalar

    full = lambda i: (0, 0)
    in_specs = [
        pl.BlockSpec((tb_eff, K_pad), lambda i: (i, 0)),    # x tile
        pl.BlockSpec((K_pad, HIDDEN), full),                # W1 (zero-padded)
        pl.BlockSpec((1, HIDDEN), full),                    # b1
        pl.BlockSpec((HIDDEN, HIDDEN), full),               # W2
        pl.BlockSpec((1, HIDDEN), full),                    # b2
        pl.BlockSpec((1, HIDDEN), full),                    # w3 as a row
        pl.BlockSpec(memory_space=pltpu.MemorySpace.SMEM),  # b3 scalar
    ]
    out_spec = pl.BlockSpec((1, tb_eff), lambda i: (0, i))  # lane-dense output

    out = pl.pallas_call(
        _mlp_kernel,
        out_shape=jax.ShapeDtypeStruct((1, B_pad), jnp.float32),
        grid=(num_tiles,),
        in_specs=in_specs,
        out_specs=out_spec,
        compiler_params=pltpu.CompilerParams(
            dimension_semantics=("parallel",)),
    )(x, w1p, b1f, w2c, b2f, w3r, b3s)

    return out.reshape(B_pad, 1)[:B]


def init_params(key, state_dim, action_dim):
    """Deterministic init mimicking nn.Linear's U(-1/sqrt(fan_in), 1/sqrt(fan_in))."""
    ks = jax.random.split(key, 6)
    in1 = state_dim + action_dim

    def u(k, shape, fan_in):
        bound = 1.0 / jnp.sqrt(fan_in)
        return jax.random.uniform(k, shape, jnp.float32, -bound, bound)

    w1 = u(ks[0], (in1, HIDDEN), in1)          # [S+A, 256]
    b1 = u(ks[1], (1, HIDDEN), in1)
    w2 = u(ks[2], (HIDDEN, HIDDEN), HIDDEN)    # [256, 256]
    b2 = u(ks[3], (1, HIDDEN), HIDDEN)
    w3 = u(ks[4], (HIDDEN, 1), HIDDEN)         # [256, 1]
    b3 = u(ks[5], (1, 1), HIDDEN)
    return (w1, b1, w2, b2, w3, b3)


def reference_forward(state, action, params, weight_dtype=jnp.bfloat16):
    """Pure-JAX reference using the same bf16 weight/activation quantization."""
    w1, b1, w2, b2, w3, b3 = params
    q = lambda t: t.astype(weight_dtype).astype(jnp.float32)
    x = jnp.concatenate([state, action], axis=1)
    h1 = jnp.maximum(q(x) @ q(w1) + b1, 0.0)
    h2 = jnp.maximum(q(h1) @ q(w2) + b2, 0.0)
    return h2 @ w3 + b3


if __name__ == "__main__":
    key = jax.random.PRNGKey(0)
    k_s, k_a, k_p = jax.random.split(key, 3)

    B, STATE_DIM, ACTION_DIM = 8, 12, 4
    state = jax.random.normal(k_s, (B, STATE_DIM), jnp.float32)
    action = jax.random.normal(k_a, (B, ACTION_DIM), jnp.float32)
    params = init_params(k_p, STATE_DIM, ACTION_DIM)

    out = jax.block_until_ready(lip_random_reward(state, action, params))
    ref = reference_forward(state, action, params)
    assert out.shape == (B, 1)
    assert jnp.allclose(out, ref, atol=1e-3, rtol=1e-2), (out, ref)

    # Ragged / multi-tile batch: exercises the pad-and-slice path and >=2
    # parallel grid steps (2-TC sharding on v7x).
    B2 = 300
    k_s2, k_a2 = jax.random.split(jax.random.PRNGKey(1))
    state2 = jax.random.normal(k_s2, (B2, STATE_DIM), jnp.float32)
    action2 = jax.random.normal(k_a2, (B2, ACTION_DIM), jnp.float32)
    out2 = jax.block_until_ready(lip_random_reward(state2, action2, params))
    ref2 = reference_forward(state2, action2, params)
    assert out2.shape == (B2, 1)
    assert jnp.allclose(out2, ref2, atol=1e-3, rtol=1e-2), (out2, ref2)

    print("KERNEL_OK")
</pallas_src>

<mosaic_0001>
module attributes {stable_mosaic.version = 11 : i64} {
  func.func @_mlp_kernel(%arg0: i32, %arg1: memref<128x128xbf16, #tpu.memory_space<vmem>>, %arg2: memref<128x256xbf16, #tpu.memory_space<vmem>>, %arg3: memref<1x256xf32, #tpu.memory_space<vmem>>, %arg4: memref<256x256xbf16, #tpu.memory_space<vmem>>, %arg5: memref<1x256xf32, #tpu.memory_space<vmem>>, %arg6: memref<1x256xf32, #tpu.memory_space<vmem>>, %arg7: memref<1x1xf32, #tpu.memory_space<smem>>, %arg8: memref<1x128xf32, #tpu.memory_space<vmem>>) attributes {dimension_semantics = [#tpu.dimension_semantics<parallel>], iteration_bounds = array<i64: 1>, scalar_prefetch = 0 : i64, scratch_operands = 0 : i64, tpu.core_type = #tpu.core_type<tc>, window_params = [{transform_indices = @transform_0, window_bounds = array<i64: 128, 128>}, {pipeline_mode = #tpu.pipeline_mode<synchronous>, transform_indices = @transform_1, window_bounds = array<i64: 128, 256>}, {pipeline_mode = #tpu.pipeline_mode<synchronous>, transform_indices = @transform_2, window_bounds = array<i64: 1, 256>}, {pipeline_mode = #tpu.pipeline_mode<synchronous>, transform_indices = @transform_3, window_bounds = array<i64: 256, 256>}, {pipeline_mode = #tpu.pipeline_mode<synchronous>, transform_indices = @transform_4, window_bounds = array<i64: 1, 256>}, {pipeline_mode = #tpu.pipeline_mode<synchronous>, transform_indices = @transform_5, window_bounds = array<i64: 1, 256>}, {transform_indices = @transform_6, window_bounds = array<i64: 1, 1>}, {transform_indices = @transform_7, window_bounds = array<i64: 1, 128>}]} {
    %c0 = arith.constant 0 : index
    %c0_0 = arith.constant 0 : index
    %0 = vector.load %arg1[%c0, %c0_0] : memref<128x128xbf16, #tpu.memory_space<vmem>>, vector<128x128xbf16>
    %c0_1 = arith.constant 0 : index
    %c0_2 = arith.constant 0 : index
    %1 = vector.load %arg2[%c0_1, %c0_2] : memref<128x256xbf16, #tpu.memory_space<vmem>>, vector<128x256xbf16>
    %cst = arith.constant dense<0.000000e+00> : vector<128x256xf32>
    %2 = tpu.matmul %0, %1, %cst {dimension_numbers = #tpu.dot_dimension_numbers<[1], [0], [0], [1], [0, 0, 1, 1], [], []>} : vector<128x128xbf16>, vector<128x256xbf16>, vector<128x256xf32> -> vector<128x256xf32>
    %c0_3 = arith.constant 0 : index
    %c0_4 = arith.constant 0 : index
    %3 = vector.load %arg3[%c0_3, %c0_4] : memref<1x256xf32, #tpu.memory_space<vmem>>, vector<1x256xf32>
    %4 = vector.broadcast %3 : vector<1x256xf32> to vector<128x256xf32>
    %5 = arith.addf %2, %4 : vector<128x256xf32>
    %cst_5 = arith.constant 0.000000e+00 : f32
    %6 = vector.broadcast %cst_5 : f32 to vector<128x256xf32>
    %7 = arith.maximumf %5, %6 : vector<128x256xf32>
    %8 = arith.truncf %7 : vector<128x256xf32> to vector<128x256xbf16>
    %c0_6 = arith.constant 0 : index
    %c0_7 = arith.constant 0 : index
    %9 = vector.load %arg4[%c0_6, %c0_7] : memref<256x256xbf16, #tpu.memory_space<vmem>>, vector<256x256xbf16>
    %cst_8 = arith.constant dense<0.000000e+00> : vector<128x256xf32>
    %10 = tpu.matmul %8, %9, %cst_8 {dimension_numbers = #tpu.dot_dimension_numbers<[1], [0], [0], [1], [0, 0, 1, 1], [], []>} : vector<128x256xbf16>, vector<256x256xbf16>, vector<128x256xf32> -> vector<128x256xf32>
    %c0_9 = arith.constant 0 : index
    %c0_10 = arith.constant 0 : index
    %11 = vector.load %arg5[%c0_9, %c0_10] : memref<1x256xf32, #tpu.memory_space<vmem>>, vector<1x256xf32>
    %12 = vector.broadcast %11 : vector<1x256xf32> to vector<128x256xf32>
    %13 = arith.addf %10, %12 : vector<128x256xf32>
    %cst_11 = arith.constant 0.000000e+00 : f32
    %14 = vector.broadcast %cst_11 : f32 to vector<128x256xf32>
    %15 = arith.maximumf %13, %14 : vector<128x256xf32>
    %c0_12 = arith.constant 0 : index
    %c0_13 = arith.constant 0 : index
    %16 = vector.load %arg6[%c0_12, %c0_13] : memref<1x256xf32, #tpu.memory_space<vmem>>, vector<1x256xf32>
    %17 = vector.broadcast %16 : vector<1x256xf32> to vector<128x256xf32>
    %18 = arith.mulf %15, %17 : vector<128x256xf32>
    %cst_14 = arith.constant dense<0.000000e+00> : vector<128xf32>
    %19 = vector.multi_reduction <add>, %18, %cst_14 [1] : vector<128x256xf32> to vector<128xf32>
    %c0_15 = arith.constant 0 : index
    %c0_16 = arith.constant 0 : index
    %20 = memref.load %arg7[%c0_15, %c0_16] : memref<1x1xf32, #tpu.memory_space<smem>>
    %21 = vector.broadcast %20 : f32 to vector<128xf32>
    %22 = arith.addf %19, %21 : vector<128xf32>
    %23 = vector.shape_cast %22 : vector<128xf32> to vector<1x128xf32>
    %c0_17 = arith.constant 0 : index
    %c0_18 = arith.constant 0 : index
    %24 = vector.load %arg8[%c0_17, %c0_18] : memref<1x128xf32, #tpu.memory_space<vmem>>, vector<1x128xf32>
    tpu.vector_store %arg8[%c0_17, %c0_18], %23 {strides = array<i32>} : memref<1x128xf32, #tpu.memory_space<vmem>>, vector<1x128xf32>,
    return
  }
  func.func @transform_0(%arg0: i32) -> (i32, i32) {
    %c0_i32 = arith.constant 0 : i32
    %c0_i32_0 = arith.constant 0 : i32
    return %arg0, %c0_i32 : i32, i32
  }
  func.func @transform_1(%arg0: i32) -> (i32, i32) {
    %c0_i32 = arith.constant 0 : i32
    %c0_i32_0 = arith.constant 0 : i32
    %c0_i32_1 = arith.constant 0 : i32
    return %c0_i32, %c0_i32_0 : i32, i32
  }
  func.func @transform_2(%arg0: i32) -> (i32, i32) {
    %c0_i32 = arith.constant 0 : i32
    %c0_i32_0 = arith.constant 0 : i32
    %c0_i32_1 = arith.constant 0 : i32
    return %c0_i32, %c0_i32_0 : i32, i32
  }
  func.func @transform_3(%arg0: i32) -> (i32, i32) {
    %c0_i32 = arith.constant 0 : i32
    %c0_i32_0 = arith.constant 0 : i32
    %c0_i32_1 = arith.constant 0 : i32
    return %c0_i32, %c0_i32_0 : i32, i32
  }
  func.func @transform_4(%arg0: i32) -> (i32, i32) {
    %c0_i32 = arith.constant 0 : i32
    %c0_i32_0 = arith.constant 0 : i32
    %c0_i32_1 = arith.constant 0 : i32
    return %c0_i32, %c0_i32_0 : i32, i32
  }
  func.func @transform_5(%arg0: i32) -> (i32, i32) {
    %c0_i32 = arith.constant 0 : i32
    %c0_i32_0 = arith.constant 0 : i32
    %c0_i32_1 = arith.constant 0 : i32
    return %c0_i32, %c0_i32_0 : i32, i32
  }
  func.func @transform_6(%arg0: i32) -> (i32, i32) {
    %c0_i32 = arith.constant 0 : i32
    %c0_i32_0 = arith.constant 0 : i32
    %c0_i32_1 = arith.constant 0 : i32
    return %c0_i32, %c0_i32_0 : i32, i32
  }
  func.func @transform_7(%arg0: i32) -> (i32, i32) {
    %c0_i32 = arith.constant 0 : i32
    %c0_i32_0 = arith.constant 0 : i32
    return %c0_i32, %arg0 : i32, i32
  }
}

</mosaic_0001>

<llo_original>
// kernel: lip_random_reward.1
$region0: #{lip_random_reward.1}
  #allocation0 [shape = 'u32[]', space=smem, size = 0x4, offset = 0x4, fixed_abs, tag = 'smem constant byte address 0x4 - core index']
  #allocation1 [shape = 'u32[144,128]{1,0:T(1,128)}', space=vmem, size = 0x12000, scoped, tag = 'internal scratch']
  #allocation2 [shape = 'f32[1,1]{1,0:T(1,128)S(6)}', space=smem, size = 0x200, scoped, tag = 'scoped memory for lip_random_reward.1']
  %s0 = inlined_call_operand.vmem [shape: bf16[128,128], index: 0, kind: input, shape index: {}]
  %s1 = inlined_call_operand.vmem [shape: bf16[128,256], index: 1, kind: input, shape index: {}]
  %s2 = inlined_call_operand.vmem [shape: f32[1,256], index: 2, kind: input, shape index: {}]
  %s3 = inlined_call_operand.vmem [shape: bf16[256,256], index: 3, kind: input, shape index: {}]
  %s4 = inlined_call_operand.vmem [shape: f32[1,256], index: 4, kind: input, shape index: {}]
  %s5 = inlined_call_operand.vmem [shape: f32[1,256], index: 5, kind: input, shape index: {}]
  %s6 = inlined_call_operand.<no memory space> [shape: f32[1,1], index: 6, kind: input, shape index: {}]
  %s7 = inlined_call_operand.vmem [shape: f32[1,128], index: 7, kind: output, shape index: {}]
  %s8 = sld [smem:[#allocation0]]
  $region38: #{lip_random_reward.1} parent=0
    _
  %s10 = ssub.s32 1, %s8
  %s11 = scalar_select 0, %s10, %s8
  %12 = sst [smem:[#allocation2]] %s6
  // Predicated region
  $region2: #{lip_random_reward.1} parent=0 // pred_check
    _
  $region3: #{lip_random_reward.1} parent=0 // pred_check_branch
    %14 = sbr.rel (0) target = $region5
  $region4: #{lip_random_reward.1} parent=0 // pred_region
    _
  $region5: #{lip_random_reward.1} parent=0 // pred_fallthru
    _
  // Predicated region
  $region6: #{lip_random_reward.1} parent=0 // pred_check
    _
  $region7: #{lip_random_reward.1} parent=0 // pred_check_branch
    %16 = sbr.rel (0) target = $region9
  $region8: #{lip_random_reward.1} parent=0 // pred_region
    _
  $region9: #{lip_random_reward.1} parent=0 // pred_fallthru
    _
  // Predicated region
  $region10: #{lip_random_reward.1} parent=0 // pred_check
    _
  $region11: #{lip_random_reward.1} parent=0 // pred_check_branch
    %18 = sbr.rel (0) target = $region13
  $region12: #{lip_random_reward.1} parent=0 // pred_region
    _
  $region13: #{lip_random_reward.1} parent=0 // pred_fallthru
    _
  // Predicated region
  $region14: #{lip_random_reward.1} parent=0 // pred_check
    _
  $region15: #{lip_random_reward.1} parent=0 // pred_check_branch
    %20 = sbr.rel (0) target = $region17
  $region16: #{lip_random_reward.1} parent=0 // pred_region
    _
  $region17: #{lip_random_reward.1} parent=0 // pred_fallthru
    _
  // Predicated region
  $region18: #{lip_random_reward.1} parent=0 // pred_check
    _
  $region19: #{lip_random_reward.1} parent=0 // pred_check_branch
    %22 = sbr.rel (0) target = $region21
  $region20: #{lip_random_reward.1} parent=0 // pred_region
    _
  $region21: #{lip_random_reward.1} parent=0 // pred_fallthru
    _
  // Predicated region
  $region22: #{lip_random_reward.1} parent=0 // pred_check
    _
  $region23: #{lip_random_reward.1} parent=0 // pred_check_branch
    %24 = sbr.rel (0) target = $region25
  $region24: #{lip_random_reward.1} parent=0 // pred_region
    _
  $region25: #{lip_random_reward.1} parent=0 // pred_fallthru
    _
  // Predicated region
  $region26: #{lip_random_reward.1} parent=0 // pred_check
    _
  $region27: #{lip_random_reward.1} parent=0 // pred_check_branch
    %26 = sbr.rel (0) target = $region29
  $region28: #{lip_random_reward.1} parent=0 // pred_region
    _
  $region29: #{lip_random_reward.1} parent=0 // pred_fallthru
    _
  %v28 = vld [vmem:[%s0] sm:$0xf]
  %v29 = vld [vmem:[%s0 + $0x4] sm:$0xf]
  %v30 = vld [vmem:[%s0 + $0x8] sm:$0xf]
  %v31 = vld [vmem:[%s0 + $0xc] sm:$0xf]
  %v32 = vld [vmem:[%s0 + $0x10] sm:$0xf]
  %v33 = vld [vmem:[%s0 + $0x14] sm:$0xf]
  %v34 = vld [vmem:[%s0 + $0x18] sm:$0xf]
  %v35 = vld [vmem:[%s0 + $0x1c] sm:$0xf]
  %v36 = vld [vmem:[%s0 + $0x20] sm:$0xf]
  %v37 = vld [vmem:[%s0 + $0x24] sm:$0xf]
  %v38 = vld [vmem:[%s0 + $0x28] sm:$0xf]
  %v39 = vld [vmem:[%s0 + $0x2c] sm:$0xf]
  %v40 = vld [vmem:[%s0 + $0x30] sm:$0xf]
  %v41 = vld [vmem:[%s0 + $0x34] sm:$0xf]
  %v42 = vld [vmem:[%s0 + $0x38] sm:$0xf]
  %v43 = vld [vmem:[%s0 + $0x3c] sm:$0xf]
  %v44 = vld [vmem:[%s1] sm:$0xff]
  %v45 = vld [vmem:[%s1 + $0x8] sm:$0xff]
  %v46 = vld [vmem:[%s1 + $0x10] sm:$0xff]
  %v47 = vld [vmem:[%s1 + $0x18] sm:$0xff]
  %v48 = vld [vmem:[%s1 + $0x20] sm:$0xff]
  %v49 = vld [vmem:[%s1 + $0x28] sm:$0xff]
  %v50 = vld [vmem:[%s1 + $0x30] sm:$0xff]
  %v51 = vld [vmem:[%s1 + $0x38] sm:$0xff]
  %v52 = vld [vmem:[%s1 + $0x40] sm:$0xff]
  %v53 = vld [vmem:[%s1 + $0x48] sm:$0xff]
  %v54 = vld [vmem:[%s1 + $0x50] sm:$0xff]
  %v55 = vld [vmem:[%s1 + $0x58] sm:$0xff]
  %v56 = vld [vmem:[%s1 + $0x60] sm:$0xff]
  %v57 = vld [vmem:[%s1 + $0x68] sm:$0xff]
  %v58 = vld [vmem:[%s1 + $0x70] sm:$0xff]
  %v59 = vld [vmem:[%s1 + $0x78] sm:$0xff]
  %v60 = vld [vmem:[%s2] sm:$0x3]
  %v62 = vlaneseq
  %v63 = vshrl.u32 %v62, 7
  %v64 = vsub.s32 0, %v63
  %v65 = vrot.slane %v60, %v64
  %v66 = vlaneseq
  %v67 = vshrl.u32 %v66, 7
  %v68 = vsub.s32 1, %v67
  %v69 = vrot.slane %v60, %v68
  %v88 = vunpack.c.l.b16 %v28
  %v89 = vunpack.c.l.b16 %v29
  %v90 = vunpack.c.l.b16 %v30
  %v91 = vunpack.c.l.b16 %v31
  %v92 = vunpack.c.l.b16 %v32
  %v93 = vunpack.c.l.b16 %v33
  %v94 = vunpack.c.l.b16 %v34
  %v95 = vunpack.c.l.b16 %v35
  %v96 = vunpack.c.l.b16 %v36
  %v97 = vunpack.c.l.b16 %v37
  %v98 = vunpack.c.l.b16 %v38
  %v99 = vunpack.c.l.b16 %v39
  %v100 = vunpack.c.l.b16 %v40
  %v101 = vunpack.c.l.b16 %v41
  %v102 = vunpack.c.l.b16 %v42
  %v103 = vunpack.c.l.b16 %v43
  %v104 = vpack.c.b16 %v89, %v88
  %v105 = vpack.c.b16 %v91, %v90
  %v106 = vpack.c.b16 %v93, %v92
  %v107 = vpack.c.b16 %v95, %v94
  %v108 = vpack.c.b16 %v97, %v96
  %v109 = vpack.c.b16 %v99, %v98
  %v110 = vpack.c.b16 %v101, %v100
  %v111 = vpack.c.b16 %v103, %v102
  %v136 = vunpack.c.l.b16 %v44
  %v137 = vunpack.c.h.b16 %v44
  %v138 = vunpack.c.l.b16 %v45
  %v139 = vunpack.c.h.b16 %v45
  %v140 = vunpack.c.l.b16 %v46
  %v141 = vunpack.c.h.b16 %v46
  %v142 = vunpack.c.l.b16 %v47
  %v143 = vunpack.c.h.b16 %v47
  %v144 = vunpack.c.l.b16 %v48
  %v145 = vunpack.c.h.b16 %v48
  %v146 = vunpack.c.l.b16 %v49
  %v147 = vunpack.c.h.b16 %v49
  %v148 = vunpack.c.l.b16 %v50
  %v149 = vunpack.c.h.b16 %v50
  %v150 = vunpack.c.l.b16 %v51
  %v151 = vunpack.c.h.b16 %v51
  %v152 = vunpack.c.l.b16 %v52
  %v153 = vunpack.c.h.b16 %v52
  %v154 = vunpack.c.l.b16 %v53
  %v155 = vunpack.c.h.b16 %v53
  %v156 = vunpack.c.l.b16 %v54
  %v157 = vunpack.c.h.b16 %v54
  %v158 = vunpack.c.l.b16 %v55
  %v159 = vunpack.c.h.b16 %v55
  %v160 = vunpack.c.l.b16 %v56
  %v161 = vunpack.c.h.b16 %v56
  %v162 = vunpack.c.l.b16 %v57
  %v163 = vunpack.c.h.b16 %v57
  %v164 = vunpack.c.l.b16 %v58
  %v165 = vunpack.c.h.b16 %v58
  %v166 = vunpack.c.l.b16 %v59
  %v167 = vunpack.c.h.b16 %v59
  %v168 = vpack.c.b16 %v138, %v136
  %v169 = vpack.c.b16 %v139, %v137
  %v170 = vpack.c.b16 %v142, %v140
  %v171 = vpack.c.b16 %v143, %v141
  %v172 = vpack.c.b16 %v146, %v144
  %v173 = vpack.c.b16 %v147, %v145
  %v174 = vpack.c.b16 %v150, %v148
  %v175 = vpack.c.b16 %v151, %v149
  %v176 = vpack.c.b16 %v154, %v152
  %v177 = vpack.c.b16 %v155, %v153
  %v178 = vpack.c.b16 %v158, %v156
  %v179 = vpack.c.b16 %v159, %v157
  %v180 = vpack.c.b16 %v162, %v160
  %v181 = vpack.c.b16 %v163, %v161
  %v182 = vpack.c.b16 %v166, %v164
  %v183 = vpack.c.b16 %v167, %v165
  %200 = vmatprep.subr.bf16.mxu0 %v169
  %201 = vmatpush1.bf16.msra.mxu0 %v168
  %202 = vmatprep.subr.bf16.mxu0 %v171
  %203 = vmatpush1.bf16.msra.mxu0 %v170
  %204 = vmatprep.subr.bf16.mxu0 %v173
  %205 = vmatpush1.bf16.msra.mxu0 %v172
  %206 = vmatprep.subr.bf16.mxu0 %v175
  %207 = vmatpush1.bf16.msra.mxu0 %v174
  %208 = vmatprep.subr.bf16.mxu0 %v177
  %209 = vmatpush1.bf16.msra.mxu0 %v176
  %210 = vmatprep.subr.bf16.mxu0 %v179
  %211 = vmatpush1.bf16.msra.mxu0 %v178
  %212 = vmatprep.subr.bf16.mxu0 %v181
  %213 = vmatpush1.bf16.msra.mxu0 %v180
  %214 = vmatprep.subr.bf16.mxu0 %v183
  %215 = vmatpush1.bf16.msra.mxu0 %v182
  %216 = vmatprep.subr.bf16.mxu0 0
  %217 = vmatpush1.bf16.msra.mxu0 0
  %218 = vmatprep.subr.bf16.mxu0 0
  %219 = vmatpush1.bf16.msra.mxu0 0
  %220 = vmatprep.subr.bf16.mxu0 0
  %221 = vmatpush1.bf16.msra.mxu0 0
  %222 = vmatprep.subr.bf16.mxu0 0
  %223 = vmatpush1.bf16.msra.mxu0 0
  %224 = vmatprep.subr.bf16.mxu0 0
  %225 = vmatpush1.bf16.msra.mxu0 0
  %226 = vmatprep.subr.bf16.mxu0 0
  %227 = vmatpush1.bf16.msra.mxu0 0
  %228 = vmatprep.subr.bf16.mxu0 0
  %229 = vmatpush1.bf16.msra.mxu0 0
  %230 = vmatprep.subr.bf16.mxu0 0
  %231 = vmatpush1.bf16.msra.mxu0 0
  %232 = vmatprep.mubr.bf16.mxu0 0
  %233 = vmatmul.mubr.bf16.gmra.mrb[0].mxu0 %v104
  %v234 = vpop.f32.mrb[0].mxu0
  %v235 = vadd.f32 %v65, %v234
  %v236 = vpop.f32.mrb[0].mxu0
  %v237 = vadd.f32 %v69, %v236
  %v238 = vpop.f32.mrb[0].mxu0
  %v239 = vadd.f32 %v65, %v238
  %v240 = vpop.f32.mrb[0].mxu0
  %v241 = vadd.f32 %v69, %v240
  %242 = vmatprep.mubr.bf16.mxu0 0
  %243 = vmatmul.mubr.bf16.gmra.mrb[0].mxu0 %v105
  %v244 = vpop.f32.mrb[0].mxu0
  %v245 = vadd.f32 %v65, %v244
  %v246 = vpop.f32.mrb[0].mxu0
  %v247 = vadd.f32 %v69, %v246
  %v248 = vpop.f32.mrb[0].mxu0
  %v249 = vadd.f32 %v65, %v248
  %v250 = vpop.f32.mrb[0].mxu0
  %v251 = vadd.f32 %v69, %v250
  %252 = vmatprep.mubr.bf16.mxu0 0
  %253 = vmatmul.mubr.bf16.gmra.mrb[0].mxu0 %v106
  %v254 = vpop.f32.mrb[0].mxu0
  %v255 = vadd.f32 %v65, %v254
  %v256 = vpop.f32.mrb[0].mxu0
  %v257 = vadd.f32 %v69, %v256
  %v258 = vpop.f32.mrb[0].mxu0
  %v259 = vadd.f32 %v65, %v258
  %v260 = vpop.f32.mrb[0].mxu0
  %v261 = vadd.f32 %v69, %v260
  %262 = vmatprep.mubr.bf16.mxu0 0
  %263 = vmatmul.mubr.bf16.gmra.mrb[0].mxu0 %v107
  %v264 = vpop.f32.mrb[0].mxu0
  %v265 = vadd.f32 %v65, %v264
  %v266 = vpop.f32.mrb[0].mxu0
  %v267 = vadd.f32 %v69, %v266
  %v268 = vpop.f32.mrb[0].mxu0
  %v269 = vadd.f32 %v65, %v268
  %v270 = vpop.f32.mrb[0].mxu0
  %v271 = vadd.f32 %v69, %v270
  %272 = vmatprep.mubr.bf16.mxu0 0
  %273 = vmatmul.mubr.bf16.gmra.mrb[0].mxu0 %v108
  %v274 = vpop.f32.mrb[0].mxu0
  %v275 = vadd.f32 %v65, %v274
  %v276 = vpop.f32.mrb[0].mxu0
  %v277 = vadd.f32 %v69, %v276
  %v278 = vpop.f32.mrb[0].mxu0
  %v279 = vadd.f32 %v65, %v278
  %v280 = vpop.f32.mrb[0].mxu0
  %v281 = vadd.f32 %v69, %v280
  %282 = vmatprep.mubr.bf16.mxu0 0
  %283 = vmatmul.mubr.bf16.gmra.mrb[0].mxu0 %v109
  %v284 = vpop.f32.mrb[0].mxu0
  %v285 = vadd.f32 %v65, %v284
  %v286 = vpop.f32.mrb[0].mxu0
  %v287 = vadd.f32 %v69, %v286
  %v288 = vpop.f32.mrb[0].mxu0
  %v289 = vadd.f32 %v65, %v288
  %v290 = vpop.f32.mrb[0].mxu0
  %v291 = vadd.f32 %v69, %v290
  %292 = vmatprep.mubr.bf16.mxu0 0
  %293 = vmatmul.mubr.bf16.gmra.mrb[0].mxu0 %v110
  %v294 = vpop.f32.mrb[0].mxu0
  %v295 = vadd.f32 %v65, %v294
  %v296 = vpop.f32.mrb[0].mxu0
  %v297 = vadd.f32 %v69, %v296
  %v298 = vpop.f32.mrb[0].mxu0
  %v299 = vadd.f32 %v65, %v298
  %v300 = vpop.f32.mrb[0].mxu0
  %v301 = vadd.f32 %v69, %v300
  %302 = vmatprep.mubr.bf16.mxu0 0
  %303 = vmatmul.mubr.bf16.gmra.mrb[0].mxu0 %v111
  %v304 = vpop.f32.mrb[0].mxu0
  %v305 = vadd.f32 %v65, %v304
  %v306 = vpop.f32.mrb[0].mxu0
  %v307 = vadd.f32 %v69, %v306
  %v308 = vpop.f32.mrb[0].mxu0
  %v309 = vadd.f32 %v65, %v308
  %v310 = vpop.f32.mrb[0].mxu0
  %v311 = vadd.f32 %v69, %v310
  %312 = vdwg.mxu0
  %v313 = vmax.f32 %v235, 0.0
  %v314 = vmax.f32 %v237, 0.0
  %v315 = vmax.f32 %v239, 0.0
  %v316 = vmax.f32 %v241, 0.0
  %v317 = vmax.f32 %v245, 0.0
  %v318 = vmax.f32 %v247, 0.0
  %v319 = vmax.f32 %v249, 0.0
  %v320 = vmax.f32 %v251, 0.0
  %v321 = vmax.f32 %v255, 0.0
  %v322 = vmax.f32 %v257, 0.0
  %v323 = vmax.f32 %v259, 0.0
  %v324 = vmax.f32 %v261, 0.0
  %v325 = vmax.f32 %v265, 0.0
  %v326 = vmax.f32 %v267, 0.0
  %v327 = vmax.f32 %v269, 0.0
  %v328 = vmax.f32 %v271, 0.0
  %v329 = vmax.f32 %v275, 0.0
  %v330 = vmax.f32 %v277, 0.0
  %v331 = vmax.f32 %v279, 0.0
  %v332 = vmax.f32 %v281, 0.0
  %v333 = vmax.f32 %v285, 0.0
  %v334 = vmax.f32 %v287, 0.0
  %v335 = vmax.f32 %v289, 0.0
  %v336 = vmax.f32 %v291, 0.0
  %v337 = vmax.f32 %v295, 0.0
  %v338 = vmax.f32 %v297, 0.0
  %v339 = vmax.f32 %v299, 0.0
  %v340 = vmax.f32 %v301, 0.0
  %v341 = vmax.f32 %v305, 0.0
  %v342 = vmax.f32 %v307, 0.0
  %v343 = vmax.f32 %v309, 0.0
  %v344 = vmax.f32 %v311, 0.0
  %v345 = vpack.c.bf16 %v315, %v313
  %v346 = vpack.c.bf16 %v316, %v314
  %v347 = vpack.c.bf16 %v319, %v317
  %v348 = vpack.c.bf16 %v320, %v318
  %v349 = vpack.c.bf16 %v323, %v321
  %v350 = vpack.c.bf16 %v324, %v322
  %v351 = vpack.c.bf16 %v327, %v325
  %v352 = vpack.c.bf16 %v328, %v326
  %v353 = vpack.c.bf16 %v331, %v329
  %v354 = vpack.c.bf16 %v332, %v330
  %v355 = vpack.c.bf16 %v335, %v333
  %v356 = vpack.c.bf16 %v336, %v334
  %v357 = vpack.c.bf16 %v339, %v337
  %v358 = vpack.c.bf16 %v340, %v338
  %v359 = vpack.c.bf16 %v343, %v341
  %v360 = vpack.c.bf16 %v344, %v342
  %v361 = vld [vmem:[%s3] sm:$0xff]
  %v362 = vld [vmem:[%s3 + $0x8] sm:$0xff]
  %v363 = vld [vmem:[%s3 + $0x10] sm:$0xff]
  %v364 = vld [vmem:[%s3 + $0x18] sm:$0xff]
  %v365 = vld [vmem:[%s3 + $0x20] sm:$0xff]
  %v366 = vld [vmem:[%s3 + $0x28] sm:$0xff]
  %v367 = vld [vmem:[%s3 + $0x30] sm:$0xff]
  %v368 = vld [vmem:[%s3 + $0x38] sm:$0xff]
  %v369 = vld [vmem:[%s3 + $0x40] sm:$0xff]
  %v370 = vld [vmem:[%s3 + $0x48] sm:$0xff]
  %v371 = vld [vmem:[%s3 + $0x50] sm:$0xff]
  %v372 = vld [vmem:[%s3 + $0x58] sm:$0xff]
  %v373 = vld [vmem:[%s3 + $0x60] sm:$0xff]
  %v374 = vld [vmem:[%s3 + $0x68] sm:$0xff]
  %v375 = vld [vmem:[%s3 + $0x70] sm:$0xff]
  %v376 = vld [vmem:[%s3 + $0x78] sm:$0xff]
  %v377 = vld [vmem:[%s3 + $0x80] sm:$0xff]
  %v378 = vld [vmem:[%s3 + $0x88] sm:$0xff]
  %v379 = vld [vmem:[%s3 + $0x90] sm:$0xff]
  %v380 = vld [vmem:[%s3 + $0x98] sm:$0xff]
  %v381 = vld [vmem:[%s3 + $0xa0] sm:$0xff]
  %v382 = vld [vmem:[%s3 + $0xa8] sm:$0xff]
  %v383 = vld [vmem:[%s3 + $0xb0] sm:$0xff]
  %v384 = vld [vmem:[%s3 + $0xb8] sm:$0xff]
  %v385 = vld [vmem:[%s3 + $0xc0] sm:$0xff]
  %v386 = vld [vmem:[%s3 + $0xc8] sm:$0xff]
  %v387 = vld [vmem:[%s3 + $0xd0] sm:$0xff]
  %v388 = vld [vmem:[%s3 + $0xd8] sm:$0xff]
  %v389 = vld [vmem:[%s3 + $0xe0] sm:$0xff]
  %v390 = vld [vmem:[%s3 + $0xe8] sm:$0xff]
  %v391 = vld [vmem:[%s3 + $0xf0] sm:$0xff]
  %v392 = vld [vmem:[%s3 + $0xf8] sm:$0xff]
  %v393 = vld [vmem:[%s4] sm:$0x3]
  %v395 = vlaneseq
  %v396 = vshrl.u32 %v395, 7
  %v397 = vsub.s32 0, %v396
  %v398 = vrot.slane %v393, %v397
  %v399 = vlaneseq
  %v400 = vshrl.u32 %v399, 7
  %v401 = vsub.s32 1, %v400
  %v402 = vrot.slane %v393, %v401
  %v437 = vunpack.c.l.b16 %v361
  %v438 = vunpack.c.h.b16 %v361
  %v439 = vunpack.c.l.b16 %v362
  %v440 = vunpack.c.h.b16 %v362
  %v441 = vunpack.c.l.b16 %v363
  %v442 = vunpack.c.h.b16 %v363
  %v443 = vunpack.c.l.b16 %v364
  %v444 = vunpack.c.h.b16 %v364
  %v445 = vunpack.c.l.b16 %v365
  %v446 = vunpack.c.h.b16 %v365
  %v447 = vunpack.c.l.b16 %v366
  %v448 = vunpack.c.h.b16 %v366
  %v449 = vunpack.c.l.b16 %v367
  %v450 = vunpack.c.h.b16 %v367
  %v451 = vunpack.c.l.b16 %v368
  %v452 = vunpack.c.h.b16 %v368
  %v453 = vunpack.c.l.b16 %v369
  %v454 = vunpack.c.h.b16 %v369
  %v455 = vunpack.c.l.b16 %v370
  %v456 = vunpack.c.h.b16 %v370
  %v457 = vunpack.c.l.b16 %v371
  %v458 = vunpack.c.h.b16 %v371
  %v459 = vunpack.c.l.b16 %v372
  %v460 = vunpack.c.h.b16 %v372
  %v461 = vunpack.c.l.b16 %v373
  %v462 = vunpack.c.h.b16 %v373
  %v463 = vunpack.c.l.b16 %v374
  %v464 = vunpack.c.h.b16 %v374
  %v465 = vunpack.c.l.b16 %v375
  %v466 = vunpack.c.h.b16 %v375
  %v467 = vunpack.c.l.b16 %v376
  %v468 = vunpack.c.h.b16 %v376
  %v469 = vunpack.c.l.b16 %v377
  %v470 = vunpack.c.h.b16 %v377
  %v471 = vunpack.c.l.b16 %v378
  %v472 = vunpack.c.h.b16 %v378
  %v473 = vunpack.c.l.b16 %v379
  %v474 = vunpack.c.h.b16 %v379
  %v475 = vunpack.c.l.b16 %v380
  %v476 = vunpack.c.h.b16 %v380
  %v477 = vunpack.c.l.b16 %v381
  %v478 = vunpack.c.h.b16 %v381
  %v479 = vunpack.c.l.b16 %v382
  %v480 = vunpack.c.h.b16 %v382
  %v481 = vunpack.c.l.b16 %v383
  %v482 = vunpack.c.h.b16 %v383
  %v483 = vunpack.c.l.b16 %v384
  %v484 = vunpack.c.h.b16 %v384
  %v485 = vunpack.c.l.b16 %v385
  %v486 = vunpack.c.h.b16 %v385
  %v487 = vunpack.c.l.b16 %v386
  %v488 = vunpack.c.h.b16 %v386
  %v489 = vunpack.c.l.b16 %v387
  %v490 = vunpack.c.h.b16 %v387
  %v491 = vunpack.c.l.b16 %v388
  %v492 = vunpack.c.h.b16 %v388
  %v493 = vunpack.c.l.b16 %v389
  %v494 = vunpack.c.h.b16 %v389
  %v495 = vunpack.c.l.b16 %v390
  %v496 = vunpack.c.h.b16 %v390
  %v497 = vunpack.c.l.b16 %v391
  %v498 = vunpack.c.h.b16 %v391
  %v499 = vunpack.c.l.b16 %v392
  %v500 = vunpack.c.h.b16 %v392
  %v501 = vpack.c.b16 %v439, %v437
  %v502 = vpack.c.b16 %v440, %v438
  %v503 = vpack.c.b16 %v443, %v441
  %v504 = vpack.c.b16 %v444, %v442
  %v505 = vpack.c.b16 %v447, %v445
  %v506 = vpack.c.b16 %v448, %v446
  %v507 = vpack.c.b16 %v451, %v449
  %v508 = vpack.c.b16 %v452, %v450
  %v509 = vpack.c.b16 %v455, %v453
  %v510 = vpack.c.b16 %v456, %v454
  %v511 = vpack.c.b16 %v459, %v457
  %v512 = vpack.c.b16 %v460, %v458
  %v513 = vpack.c.b16 %v463, %v461
  %v514 = vpack.c.b16 %v464, %v462
  %v515 = vpack.c.b16 %v467, %v465
  %v516 = vpack.c.b16 %v468, %v466
  %v517 = vpack.c.b16 %v471, %v469
  %v518 = vpack.c.b16 %v472, %v470
  %v519 = vpack.c.b16 %v475, %v473
  %v520 = vpack.c.b16 %v476, %v474
  %v521 = vpack.c.b16 %v479, %v477
  %v522 = vpack.c.b16 %v480, %v478
  %v523 = vpack.c.b16 %v483, %v481
  %v524 = vpack.c.b16 %v484, %v482
  %v525 = vpack.c.b16 %v487, %v485
  %v526 = vpack.c.b16 %v488, %v486
  %v527 = vpack.c.b16 %v491, %v489
  %v528 = vpack.c.b16 %v492, %v490
  %v529 = vpack.c.b16 %v495, %v493
  %v530 = vpack.c.b16 %v496, %v494
  %v531 = vpack.c.b16 %v499, %v497
  %v532 = vpack.c.b16 %v500, %v498
  %565 = vmatprep.subr.bf16.mxu0 %v502
  %566 = vmatpush1.bf16.msra.mxu0 %v501
  %567 = vmatprep.subr.bf16.mxu0 %v504
  %568 = vmatpush1.bf16.msra.mxu0 %v503
  %569 = vmatprep.subr.bf16.mxu0 %v506
  %570 = vmatpush1.bf16.msra.mxu0 %v505
  %571 = vmatprep.subr.bf16.mxu0 %v508
  %572 = vmatpush1.bf16.msra.mxu0 %v507
  %573 = vmatprep.subr.bf16.mxu0 %v510
  %574 = vmatpush1.bf16.msra.mxu0 %v509
  %575 = vmatprep.subr.bf16.mxu0 %v512
  %576 = vmatpush1.bf16.msra.mxu0 %v511
  %577 = vmatprep.subr.bf16.mxu0 %v514
  %578 = vmatpush1.bf16.msra.mxu0 %v513
  %579 = vmatprep.subr.bf16.mxu0 %v516
  %580 = vmatpush1.bf16.msra.mxu0 %v515
  %581 = vmatprep.subr.bf16.mxu0 %v518
  %582 = vmatpush1.bf16.msra.mxu0 %v517
  %583 = vmatprep.subr.bf16.mxu0 %v520
  %584 = vmatpush1.bf16.msra.mxu0 %v519
  %585 = vmatprep.subr.bf16.mxu0 %v522
  %586 = vmatpush1.bf16.msra.mxu0 %v521
  %587 = vmatprep.subr.bf16.mxu0 %v524
  %588 = vmatpush1.bf16.msra.mxu0 %v523
  %589 = vmatprep.subr.bf16.mxu0 %v526
  %590 = vmatpush1.bf16.msra.mxu0 %v525
  %591 = vmatprep.subr.bf16.mxu0 %v528
  %592 = vmatpush1.bf16.msra.mxu0 %v527
  %593 = vmatprep.subr.bf16.mxu0 %v530
  %594 = vmatpush1.bf16.msra.mxu0 %v529
  %595 = vmatprep.subr.bf16.mxu0 %v532
  %596 = vmatpush1.bf16.msra.mxu0 %v531
  %597 = vmatprep.mubr.bf16.mxu0 %v346
  %598 = vmatmul.mubr.bf16.gmra.mrb[0].mxu0 %v345
  %v599 = vpop.f32.mrb[0].mxu0
  %v600 = vadd.f32 %v398, %v599
  %v601 = vpop.f32.mrb[0].mxu0
  %v602 = vadd.f32 %v402, %v601
  %v603 = vpop.f32.mrb[0].mxu0
  %v604 = vadd.f32 %v398, %v603
  %v605 = vpop.f32.mrb[0].mxu0
  %v606 = vadd.f32 %v402, %v605
  %607 = vmatprep.mubr.bf16.mxu0 %v348
  %608 = vmatmul.mubr.bf16.gmra.mrb[0].mxu0 %v347
  %v609 = vpop.f32.mrb[0].mxu0
  %v610 = vadd.f32 %v398, %v609
  %v611 = vpop.f32.mrb[0].mxu0
  %v612 = vadd.f32 %v402, %v611
  %v613 = vpop.f32.mrb[0].mxu0
  %v614 = vadd.f32 %v398, %v613
  %v615 = vpop.f32.mrb[0].mxu0
  %v616 = vadd.f32 %v402, %v615
  %617 = vmatprep.mubr.bf16.mxu0 %v350
  %618 = vmatmul.mubr.bf16.gmra.mrb[0].mxu0 %v349
  %v619 = vpop.f32.mrb[0].mxu0
  %v620 = vadd.f32 %v398, %v619
  %v621 = vpop.f32.mrb[0].mxu0
  %v622 = vadd.f32 %v402, %v621
  %v623 = vpop.f32.mrb[0].mxu0
  %v624 = vadd.f32 %v398, %v623
  %v625 = vpop.f32.mrb[0].mxu0
  %v626 = vadd.f32 %v402, %v625
  %627 = vmatprep.mubr.bf16.mxu0 %v352
  %628 = vmatmul.mubr.bf16.gmra.mrb[0].mxu0 %v351
  %v629 = vpop.f32.mrb[0].mxu0
  %v630 = vadd.f32 %v398, %v629
  %v631 = vpop.f32.mrb[0].mxu0
  %v632 = vadd.f32 %v402, %v631
  %v633 = vpop.f32.mrb[0].mxu0
  %v634 = vadd.f32 %v398, %v633
  %v635 = vpop.f32.mrb[0].mxu0
  %v636 = vadd.f32 %v402, %v635
  %637 = vmatprep.mubr.bf16.mxu0 %v354
  %638 = vmatmul.mubr.bf16.gmra.mrb[0].mxu0 %v353
  %v639 = vpop.f32.mrb[0].mxu0
  %v640 = vadd.f32 %v398, %v639
  %v641 = vpop.f32.mrb[0].mxu0
  %v642 = vadd.f32 %v402, %v641
  %v643 = vpop.f32.mrb[0].mxu0
  %v644 = vadd.f32 %v398, %v643
  %v645 = vpop.f32.mrb[0].mxu0
  %v646 = vadd.f32 %v402, %v645
  %647 = vmatprep.mubr.bf16.mxu0 %v356
  %648 = vmatmul.mubr.bf16.gmra.mrb[0].mxu0 %v355
  %v649 = vpop.f32.mrb[0].mxu0
  %v650 = vadd.f32 %v398, %v649
  %v651 = vpop.f32.mrb[0].mxu0
  %v652 = vadd.f32 %v402, %v651
  %v653 = vpop.f32.mrb[0].mxu0
  %v654 = vadd.f32 %v398, %v653
  %v655 = vpop.f32.mrb[0].mxu0
  %v656 = vadd.f32 %v402, %v655
  %657 = vmatprep.mubr.bf16.mxu0 %v358
  %658 = vmatmul.mubr.bf16.gmra.mrb[0].mxu0 %v357
  %v659 = vpop.f32.mrb[0].mxu0
  %v660 = vadd.f32 %v398, %v659
  %v661 = vpop.f32.mrb[0].mxu0
  %v662 = vadd.f32 %v402, %v661
  %v663 = vpop.f32.mrb[0].mxu0
  %v664 = vadd.f32 %v398, %v663
  %v665 = vpop.f32.mrb[0].mxu0
  %v666 = vadd.f32 %v402, %v665
  %667 = vmatprep.mubr.bf16.mxu0 %v360
  %668 = vmatmul.mubr.bf16.gmra.mrb[0].mxu0 %v359
  %v669 = vpop.f32.mrb[0].mxu0
  %v670 = vadd.f32 %v398, %v669
  %v671 = vpop.f32.mrb[0].mxu0
  %v672 = vadd.f32 %v402, %v671
  %v673 = vpop.f32.mrb[0].mxu0
  %v674 = vadd.f32 %v398, %v673
  %v675 = vpop.f32.mrb[0].mxu0
  %v676 = vadd.f32 %v402, %v675
  %677 = vdwg.mxu0
  %v678 = vmax.f32 %v600, 0.0
  %v679 = vmax.f32 %v602, 0.0
  %v680 = vmax.f32 %v604, 0.0
  %v681 = vmax.f32 %v606, 0.0
  %v682 = vmax.f32 %v610, 0.0
  %v683 = vmax.f32 %v612, 0.0
  %v684 = vmax.f32 %v614, 0.0
  %v685 = vmax.f32 %v616, 0.0
  %v686 = vmax.f32 %v620, 0.0
  %v687 = vmax.f32 %v622, 0.0
  %v688 = vmax.f32 %v624, 0.0
  %v689 = vmax.f32 %v626, 0.0
  %v690 = vmax.f32 %v630, 0.0
  %v691 = vmax.f32 %v632, 0.0
  %v692 = vmax.f32 %v634, 0.0
  %v693 = vmax.f32 %v636, 0.0
  %v694 = vmax.f32 %v640, 0.0
  %v695 = vmax.f32 %v642, 0.0
  %v696 = vmax.f32 %v644, 0.0
  %v697 = vmax.f32 %v646, 0.0
  %v698 = vmax.f32 %v650, 0.0
  %v699 = vmax.f32 %v652, 0.0
  %v700 = vmax.f32 %v654, 0.0
  %v701 = vmax.f32 %v656, 0.0
  %v702 = vmax.f32 %v660, 0.0
  %v703 = vmax.f32 %v662, 0.0
  %v704 = vmax.f32 %v664, 0.0
  %v705 = vmax.f32 %v666, 0.0
  %v706 = vmax.f32 %v670, 0.0
  %v707 = vmax.f32 %v672, 0.0
  %v708 = vmax.f32 %v674, 0.0
  %v709 = vmax.f32 %v676, 0.0
  %v710 = vld [vmem:[%s5] sm:$0x3]
  %v712 = vlaneseq
  %v713 = vshrl.u32 %v712, 7
  %v714 = vsub.s32 0, %v713
  %v715 = vrot.slane %v710, %v714
  %v716 = vlaneseq
  %v717 = vshrl.u32 %v716, 7
  %v718 = vsub.s32 1, %v717
  %v719 = vrot.slane %v710, %v718
  %v722 = vmul.f32 %v678, %v715
  %v723 = vmul.f32 %v679, %v719
  %v724 = vmul.f32 %v680, %v715
  %v725 = vmul.f32 %v681, %v719
  %v726 = vmul.f32 %v682, %v715
  %v727 = vmul.f32 %v683, %v719
  %v728 = vmul.f32 %v684, %v715
  %v729 = vmul.f32 %v685, %v719
  %v730 = vmul.f32 %v686, %v715
  %v731 = vmul.f32 %v687, %v719
  %v732 = vmul.f32 %v688, %v715
  %v733 = vmul.f32 %v689, %v719
  %v734 = vmul.f32 %v690, %v715
  %v735 = vmul.f32 %v691, %v719
  %v736 = vmul.f32 %v692, %v715
  %v737 = vmul.f32 %v693, %v719
  %v738 = vmul.f32 %v694, %v715
  %v739 = vmul.f32 %v695, %v719
  %v740 = vmul.f32 %v696, %v715
  %v741 = vmul.f32 %v697, %v719
  %v742 = vmul.f32 %v698, %v715
  %v743 = vmul.f32 %v699, %v719
  %v744 = vmul.f32 %v700, %v715
  %v745 = vmul.f32 %v701, %v719
  %v746 = vmul.f32 %v702, %v715
  %v747 = vmul.f32 %v703, %v719
  %v748 = vmul.f32 %v704, %v715
  %v749 = vmul.f32 %v705, %v719
  %v750 = vmul.f32 %v706, %v715
  %v751 = vmul.f32 %v707, %v719
  %v752 = vmul.f32 %v708, %v715
  %v753 = vmul.f32 %v709, %v719
  %v754 = vadd.f32 %v722, %v723
  %755 = vadd.xlane.f32.xlu0 %v754
  %v756 = vpop.xlane.xlu0 %755
  %v757 = vadd.f32 %v724, %v725
  %758 = vadd.xlane.f32.xlu0 %v757
  %v759 = vpop.xlane.xlu0 %758
  %v760 = vadd.f32 %v726, %v727
  %761 = vadd.xlane.f32.xlu0 %v760
  %v762 = vpop.xlane.xlu0 %761
  %v763 = vadd.f32 %v728, %v729
  %764 = vadd.xlane.f32.xlu0 %v763
  %v765 = vpop.xlane.xlu0 %764
  %v766 = vadd.f32 %v730, %v731
  %767 = vadd.xlane.f32.xlu0 %v766
  %v768 = vpop.xlane.xlu0 %767
  %v769 = vadd.f32 %v732, %v733
  %770 = vadd.xlane.f32.xlu0 %v769
  %v771 = vpop.xlane.xlu0 %770
  %v772 = vadd.f32 %v734, %v735
  %773 = vadd.xlane.f32.xlu0 %v772
  %v774 = vpop.xlane.xlu0 %773
  %v775 = vadd.f32 %v736, %v737
  %776 = vadd.xlane.f32.xlu0 %v775
  %v777 = vpop.xlane.xlu0 %776
  %v778 = vadd.f32 %v738, %v739
  %779 = vadd.xlane.f32.xlu0 %v778
  %v780 = vpop.xlane.xlu0 %779
  %v781 = vadd.f32 %v740, %v741
  %782 = vadd.xlane.f32.xlu0 %v781
  %v783 = vpop.xlane.xlu0 %782
  %v784 = vadd.f32 %v742, %v743
  %785 = vadd.xlane.f32.xlu0 %v784
  %v786 = vpop.xlane.xlu0 %785
  %v787 = vadd.f32 %v744, %v745
  %788 = vadd.xlane.f32.xlu0 %v787
  %v789 = vpop.xlane.xlu0 %788
  %v790 = vadd.f32 %v746, %v747
  %791 = vadd.xlane.f32.xlu0 %v790
  %v792 = vpop.xlane.xlu0 %791
  %v793 = vadd.f32 %v748, %v749
  %794 = vadd.xlane.f32.xlu0 %v793
  %v795 = vpop.xlane.xlu0 %794
  %v796 = vadd.f32 %v750, %v751
  %797 = vadd.xlane.f32.xlu0 %v796
  %v798 = vpop.xlane.xlu0 %797
  %v799 = vadd.f32 %v752, %v753
  %800 = vadd.xlane.f32.xlu0 %v799
  %v801 = vpop.xlane.xlu0 %800
  %s802 = sld [smem:[#allocation2]]
  %v803 = vstv %s802
  %v804 = vadd.f32 %v756, %v803
  %v805 = vadd.f32 %v759, %v803
  %v806 = vadd.f32 %v762, %v803
  %v807 = vadd.f32 %v765, %v803
  %v808 = vadd.f32 %v768, %v803
  %v809 = vadd.f32 %v771, %v803
  %v810 = vadd.f32 %v774, %v803
  %v811 = vadd.f32 %v777, %v803
  %v812 = vadd.f32 %v780, %v803
  %v813 = vadd.f32 %v783, %v803
  %v814 = vadd.f32 %v786, %v803
  %v815 = vadd.f32 %v789, %v803
  %v816 = vadd.f32 %v792, %v803
  %v817 = vadd.f32 %v795, %v803
  %v818 = vadd.f32 %v798, %v803
  %v819 = vadd.f32 %v801, %v803
  %v836 = vlaneseq
  %v837 = vand.u32 %v836, 127
  %v838 = vlaneseq
  %v839 = vshrl.u32 %v838, 7
  %v840 = vsub.s32 %v837, %v839
  %v841 = vrot.slane %v804, %v840
  %v842 = vadd.s32 %v837, 4294967288
  %v843 = vlaneseq
  %v844 = vshrl.u32 %v843, 7
  %v845 = vsub.s32 %v842, %v844
  %v846 = vrot.slane %v805, %v845
  %vm847 = vcmask 130112
  %v848 = vsel %vm847, %v846, %v841
  %v849 = vadd.s32 %v837, 4294967280
  %v850 = vlaneseq
  %v851 = vshrl.u32 %v850, 7
  %v852 = vsub.s32 %v849, %v851
  %v853 = vrot.slane %v806, %v852
  %vm854 = vcmask 195712
  %v855 = vsel %vm854, %v853, %v848
  %v856 = vadd.s32 %v837, 4294967272
  %v857 = vlaneseq
  %v858 = vshrl.u32 %v857, 7
  %v859 = vsub.s32 %v856, %v858
  %v860 = vrot.slane %v807, %v859
  %vm861 = vcmask 261312
  %v862 = vsel %vm861, %v860, %v855
  %v863 = vadd.s32 %v837, 4294967264
  %v864 = vlaneseq
  %v865 = vshrl.u32 %v864, 7
  %v866 = vsub.s32 %v863, %v865
  %v867 = vrot.slane %v808, %v866
  %vm868 = vcmask 326912
  %v869 = vsel %vm868, %v867, %v862
  %v870 = vadd.s32 %v837, 4294967256
  %v871 = vlaneseq
  %v872 = vshrl.u32 %v871, 7
  %v873 = vsub.s32 %v870, %v872
  %v874 = vrot.slane %v809, %v873
  %vm875 = vcmask 392512
  %v876 = vsel %vm875, %v874, %v869
  %v877 = vadd.s32 %v837, 4294967248
  %v878 = vlaneseq
  %v879 = vshrl.u32 %v878, 7
  %v880 = vsub.s32 %v877, %v879
  %v881 = vrot.slane %v810, %v880
  %vm882 = vcmask 458112
  %v883 = vsel %vm882, %v881, %v876
  %v884 = vadd.s32 %v837, 4294967240
  %v885 = vlaneseq
  %v886 = vshrl.u32 %v885, 7
  %v887 = vsub.s32 %v884, %v886
  %v888 = vrot.slane %v811, %v887
  %vm889 = vcmask 523712
  %v890 = vsel %vm889, %v888, %v883
  %v891 = vadd.s32 %v837, 4294967232
  %v892 = vlaneseq
  %v893 = vshrl.u32 %v892, 7
  %v894 = vsub.s32 %v891, %v893
  %v895 = vrot.slane %v812, %v894
  %vm896 = vcmask 589312
  %v897 = vsel %vm896, %v895, %v890
  %v898 = vadd.s32 %v837, 4294967224
  %v899 = vlaneseq
  %v900 = vshrl.u32 %v899, 7
  %v901 = vsub.s32 %v898, %v900
  %v902 = vrot.slane %v813, %v901
  %vm903 = vcmask 654912
  %v904 = vsel %vm903, %v902, %v897
  %v905 = vadd.s32 %v837, 4294967216
  %v906 = vlaneseq
  %v907 = vshrl.u32 %v906, 7
  %v908 = vsub.s32 %v905, %v907
  %v909 = vrot.slane %v814, %v908
  %vm910 = vcmask 720512
  %v911 = vsel %vm910, %v909, %v904
  %v912 = vadd.s32 %v837, 4294967208
  %v913 = vlaneseq
  %v914 = vshrl.u32 %v913, 7
  %v915 = vsub.s32 %v912, %v914
  %v916 = vrot.slane %v815, %v915
  %vm917 = vcmask 786112
  %v918 = vsel %vm917, %v916, %v911
  %v919 = vadd.s32 %v837, 4294967200
  %v920 = vlaneseq
  %v921 = vshrl.u32 %v920, 7
  %v922 = vsub.s32 %v919, %v921
  %v923 = vrot.slane %v816, %v922
  %vm924 = vcmask 851712
  %v925 = vsel %vm924, %v923, %v918
  %v926 = vadd.s32 %v837, 4294967192
  %v927 = vlaneseq
  %v928 = vshrl.u32 %v927, 7
  %v929 = vsub.s32 %v926, %v928
  %v930 = vrot.slane %v817, %v929
  %vm931 = vcmask 917312
  %v932 = vsel %vm931, %v930, %v925
  %v933 = vadd.s32 %v837, 4294967184
  %v934 = vlaneseq
  %v935 = vshrl.u32 %v934, 7
  %v936 = vsub.s32 %v933, %v935
  %v937 = vrot.slane %v818, %v936
  %vm938 = vcmask 982912
  %v939 = vsel %vm938, %v937, %v932
  %v940 = vadd.s32 %v837, 4294967176
  %v941 = vlaneseq
  %v942 = vshrl.u32 %v941, 7
  %v943 = vsub.s32 %v940, %v942
  %v944 = vrot.slane %v819, %v943
  %vm945 = vcmask 1048512
  %v946 = vsel %vm945, %v944, %v939
  %948 = vst [vmem:[%s7] sm:$0x1] %v946
  // Predicated region
  $region30: #{lip_random_reward.1} parent=0 // pred_check
    _
  $region31: #{lip_random_reward.1} parent=0 // pred_check_branch
    %950 = sbr.rel (0) target = $region33
  $region32: #{lip_random_reward.1} parent=0 // pred_region
    _
  $region33: #{lip_random_reward.1} parent=0 // pred_fallthru
    _
  // Predicated region
  $region34: #{lip_random_reward.1} parent=0 // pred_check
    _
  $region35: #{lip_random_reward.1} parent=0 // pred_check_branch
    %952 = sbr.rel (0) target = $region37
  $region36: #{lip_random_reward.1} parent=0 // pred_region
    _
  $region37: #{lip_random_reward.1} parent=0 // pred_fallthru
    _

</llo_original>
